<compile_context>
chip_gen: v6e
topology: v6e:2x2x1
jax: 0.10.0
libtpu: 0.0.40
codegen_flags: <defaults>
</compile_context>

<pallas_src>
import jax
import jax.numpy as jnp
from jax.experimental import pallas as pl
from jax.experimental.pallas import tpu as pltpu

D_IN = 28 * 28      # 784
H = 128             # hidden width (encoder/decoder)
TILE_B_MAX = 1024   # upper bound on the batch tile (VMEM use at 1024 is ~20 MiB)


def _round_up(n, m):
    return ((n + m - 1) // m) * m


def _cdiv(a, b):
    return -(-a // b)


def _choose_tile_b(B):
    """Pick a batch tile: multiple of 8, >= ~4 grid steps when possible, <= 1024."""
    if B <= 8:
        return max(B, 1)                       # single tiny block (full batch)
    desired_steps = 4
    tile = _round_up(_cdiv(B, desired_steps), 8)
    tile = max(32, min(tile, TILE_B_MAX))      # floor amortizes per-step overhead
    tile = min(tile, _round_up(B, 8))          # never (much) bigger than the batch
    return tile


def autoencoder_kernel(x_ref, w1_ref, b1_ref, w23_ref, b23_ref, w4_ref, b4_ref,
                       o_ref):
    """784 -> 128 (ReLU) -> [64 folded] -> 128 (ReLU) -> 784 (Sigmoid)."""
    # Input arrives as f32 straight from HBM; cast to bf16 on the VPU (which has
    # ample slack) right before the MXU matmul.
    x = x_ref[...].astype(jnp.bfloat16)                               # (TILE_B, 784)

    # Encoder layer 1 + ReLU (f32 accumulate / f32 elementwise).
    h1 = jnp.dot(x, w1_ref[...], preferred_element_type=jnp.float32) + b1_ref[...]
    h1 = jnp.maximum(h1, 0.0)                                         # (TILE_B, 128) f32

    # Folded Linear(128,64) @ Linear(64,128): no activation in between, so one
    # 128x128 matmul replaces the two narrow (64-wide) ones. Exact in math.
    h2 = jnp.dot(h1.astype(jnp.bfloat16), w23_ref[...],
                 preferred_element_type=jnp.float32) + b23_ref[...]
    h2 = jnp.maximum(h2, 0.0)                                         # (TILE_B, 128) f32

    # Decoder output layer + sigmoid. exp and approx reciprocal both run on the
    # EUP slot, keeping the VALU free for the bias add.
    y = jnp.dot(h2.astype(jnp.bfloat16), w4_ref[...],
                preferred_element_type=jnp.float32) + b4_ref[...]     # (TILE_B, 784) f32
    o_ref[...] = pl.reciprocal(1.0 + jnp.exp(-y), approx=True)


def prepare_params(params):
    """Fold w2@w3 (exact: no activation between them), cast matmul weights to bf16."""
    w1, b1, w2, b2, w3, b3, w4, b4 = params

    w23 = w2 @ w3                      # (128, 128) f32
    b23 = b2 @ w3 + b3                 # (1, 128)   f32

    return (w1.astype(jnp.bfloat16), b1,
            w23.astype(jnp.bfloat16), b23,
            w4.astype(jnp.bfloat16), b4)


def autoencoder_forward(x_nchw, params):
    """x_nchw: (B, 1, 28, 28) float32 -> (B, 1, 28, 28) float32."""
    B = x_nchw.shape[0]
    w1, b1, w23, b23, w4, b4 = prepare_params(params)

    # nn.Flatten: contiguous reshape, metadata-only (no extra HBM traffic).
    x_flat = x_nchw.reshape(B, D_IN)

    tile_b = _choose_tile_b(B)
    grid = (_cdiv(B, tile_b),)   # ragged last block; masked rows never read back

    out_flat = pl.pallas_call(
        autoencoder_kernel,
        out_shape=jax.ShapeDtypeStruct((B, D_IN), jnp.float32),
        grid=grid,
        in_specs=[
            pl.BlockSpec((tile_b, D_IN), lambda i: (i, 0)),    # x tile (pipelined)
            pl.BlockSpec((D_IN, H), lambda i: (0, 0)),         # w1  (resident)
            pl.BlockSpec((1, H), lambda i: (0, 0)),            # b1
            pl.BlockSpec((H, H), lambda i: (0, 0)),            # w23
            pl.BlockSpec((1, H), lambda i: (0, 0)),            # b23
            pl.BlockSpec((H, D_IN), lambda i: (0, 0)),         # w4
            pl.BlockSpec((1, D_IN), lambda i: (0, 0)),         # b4
        ],
        out_specs=pl.BlockSpec((tile_b, D_IN), lambda i: (i, 0)),
        compiler_params=pltpu.CompilerParams(
            dimension_semantics=("parallel",),        # 2-TC sharding on v7x
            vmem_limit_bytes=48 * 1024 * 1024,        # headroom for tile_b=1024
        ),
    )(x_flat, w1, b1, w23, b23, w4, b4)

    # nn.Unflatten(1, (1, 28, 28)): metadata-only.
    return out_flat.reshape(B, 1, 28, 28)


def init_params(key):
    """Deterministic PyTorch-style Linear init: U(-1/sqrt(fan_in), 1/sqrt(fan_in)).

    Weights are stored as (in_features, out_features) (transposed vs PyTorch so
    the kernel does x @ W + b); biases as (1, out_features).
    """
    def linear(key, fan_in, fan_out):
        kw, kb = jax.random.split(key)
        bound = 1.0 / jnp.sqrt(float(fan_in))
        w = jax.random.uniform(kw, (fan_in, fan_out), jnp.float32, -bound, bound)
        b = jax.random.uniform(kb, (1, fan_out), jnp.float32, -bound, bound)
        return w, b

    k1, k2, k3, k4 = jax.random.split(key, 4)
    w1, b1 = linear(k1, 28 * 28, 128)
    w2, b2 = linear(k2, 128, 64)
    w3, b3 = linear(k3, 64, 128)
    w4, b4 = linear(k4, 128, 28 * 28)
    return (w1, b1, w2, b2, w3, b3, w4, b4)


def reference_forward(x_nchw, params):
    """Pure-JAX f32 reference matching the PyTorch module."""
    (w1, b1, w2, b2, w3, b3, w4, b4) = params
    B = x_nchw.shape[0]
    x = x_nchw.reshape(B, 28 * 28)
    h1 = jnp.maximum(x @ w1 + b1, 0.0)
    z = h1 @ w2 + b2
    h2 = jnp.maximum(z @ w3 + b3, 0.0)
    y = h2 @ w4 + b4
    return jax.nn.sigmoid(y).reshape(B, 1, 28, 28)


if __name__ == "__main__":
    key = jax.random.PRNGKey(0)
    k_x, k_p = jax.random.split(key)

    B = 8
    x = jax.random.uniform(k_x, (B, 1, 28, 28), jnp.float32)   # MNIST-like input
    params = init_params(k_p)

    out = autoencoder_forward(x, params)
    out = jax.block_until_ready(out)

    ref = reference_forward(x, params)
    assert out.shape == (B, 1, 28, 28), out.shape
    # bf16 matmuls + approx reciprocal => loosened tolerance vs the f32 reference.
    max_err = float(jnp.max(jnp.abs(out - ref)))
    assert max_err < 2e-2, f"mismatch vs reference (max abs err {max_err})"

    print("KERNEL_OK")
</pallas_src>

<mosaic_0001>
module attributes {stable_mosaic.version = 11 : i64} {
  func.func @autoencoder_kernel(%arg0: i32, %arg1: memref<8x784xf32, #tpu.memory_space<vmem>>, %arg2: memref<784x128xbf16, #tpu.memory_space<vmem>>, %arg3: memref<1x128xf32, #tpu.memory_space<vmem>>, %arg4: memref<128x128xbf16, #tpu.memory_space<vmem>>, %arg5: memref<1x128xf32, #tpu.memory_space<vmem>>, %arg6: memref<128x784xbf16, #tpu.memory_space<vmem>>, %arg7: memref<1x784xf32, #tpu.memory_space<vmem>>, %arg8: memref<8x784xf32, #tpu.memory_space<vmem>>) attributes {dimension_semantics = [#tpu.dimension_semantics<parallel>], iteration_bounds = array<i64: 1>, scalar_prefetch = 0 : i64, scratch_operands = 0 : i64, tpu.core_type = #tpu.core_type<tc>, window_params = [{transform_indices = @transform_0, window_bounds = array<i64: 8, 784>}, {pipeline_mode = #tpu.pipeline_mode<synchronous>, transform_indices = @transform_1, window_bounds = array<i64: 784, 128>}, {pipeline_mode = #tpu.pipeline_mode<synchronous>, transform_indices = @transform_2, window_bounds = array<i64: 1, 128>}, {pipeline_mode = #tpu.pipeline_mode<synchronous>, transform_indices = @transform_3, window_bounds = array<i64: 128, 128>}, {pipeline_mode = #tpu.pipeline_mode<synchronous>, transform_indices = @transform_4, window_bounds = array<i64: 1, 128>}, {pipeline_mode = #tpu.pipeline_mode<synchronous>, transform_indices = @transform_5, window_bounds = array<i64: 128, 784>}, {pipeline_mode = #tpu.pipeline_mode<synchronous>, transform_indices = @transform_6, window_bounds = array<i64: 1, 784>}, {transform_indices = @transform_7, window_bounds = array<i64: 8, 784>}]} {
    %c0 = arith.constant 0 : index
    %c0_0 = arith.constant 0 : index
    %0 = vector.load %arg1[%c0, %c0_0] : memref<8x784xf32, #tpu.memory_space<vmem>>, vector<8x784xf32>
    %1 = arith.truncf %0 : vector<8x784xf32> to vector<8x784xbf16>
    %c0_1 = arith.constant 0 : index
    %c0_2 = arith.constant 0 : index
    %2 = vector.load %arg2[%c0_1, %c0_2] : memref<784x128xbf16, #tpu.memory_space<vmem>>, vector<784x128xbf16>
    %cst = arith.constant dense<0.000000e+00> : vector<8x128xf32>
    %3 = tpu.matmul %1, %2, %cst {dimension_numbers = #tpu.dot_dimension_numbers<[1], [0], [0], [1], [0, 0, 1, 1], [], []>} : vector<8x784xbf16>, vector<784x128xbf16>, vector<8x128xf32> -> vector<8x128xf32>
    %c0_3 = arith.constant 0 : index
    %c0_4 = arith.constant 0 : index
    %4 = vector.load %arg3[%c0_3, %c0_4] : memref<1x128xf32, #tpu.memory_space<vmem>>, vector<1x128xf32>
    %5 = vector.broadcast %4 : vector<1x128xf32> to vector<8x128xf32>
    %6 = arith.addf %3, %5 : vector<8x128xf32>
    %cst_5 = arith.constant 0.000000e+00 : f32
    %7 = vector.broadcast %cst_5 : f32 to vector<8x128xf32>
    %8 = arith.maximumf %6, %7 : vector<8x128xf32>
    %9 = arith.truncf %8 : vector<8x128xf32> to vector<8x128xbf16>
    %c0_6 = arith.constant 0 : index
    %c0_7 = arith.constant 0 : index
    %10 = vector.load %arg4[%c0_6, %c0_7] : memref<128x128xbf16, #tpu.memory_space<vmem>>, vector<128x128xbf16>
    %cst_8 = arith.constant dense<0.000000e+00> : vector<8x128xf32>
    %11 = tpu.matmul %9, %10, %cst_8 {dimension_numbers = #tpu.dot_dimension_numbers<[1], [0], [0], [1], [0, 0, 1, 1], [], []>} : vector<8x128xbf16>, vector<128x128xbf16>, vector<8x128xf32> -> vector<8x128xf32>
    %c0_9 = arith.constant 0 : index
    %c0_10 = arith.constant 0 : index
    %12 = vector.load %arg5[%c0_9, %c0_10] : memref<1x128xf32, #tpu.memory_space<vmem>>, vector<1x128xf32>
    %13 = vector.broadcast %12 : vector<1x128xf32> to vector<8x128xf32>
    %14 = arith.addf %11, %13 : vector<8x128xf32>
    %cst_11 = arith.constant 0.000000e+00 : f32
    %15 = vector.broadcast %cst_11 : f32 to vector<8x128xf32>
    %16 = arith.maximumf %14, %15 : vector<8x128xf32>
    %17 = arith.truncf %16 : vector<8x128xf32> to vector<8x128xbf16>
    %c0_12 = arith.constant 0 : index
    %c0_13 = arith.constant 0 : index
    %18 = vector.load %arg6[%c0_12, %c0_13] : memref<128x784xbf16, #tpu.memory_space<vmem>>, vector<128x784xbf16>
    %cst_14 = arith.constant dense<0.000000e+00> : vector<8x784xf32>
    %19 = tpu.matmul %17, %18, %cst_14 {dimension_numbers = #tpu.dot_dimension_numbers<[1], [0], [0], [1], [0, 0, 1, 1], [], []>} : vector<8x128xbf16>, vector<128x784xbf16>, vector<8x784xf32> -> vector<8x784xf32>
    %c0_15 = arith.constant 0 : index
    %c0_16 = arith.constant 0 : index
    %20 = vector.load %arg7[%c0_15, %c0_16] : memref<1x784xf32, #tpu.memory_space<vmem>>, vector<1x784xf32>
    %21 = vector.broadcast %20 : vector<1x784xf32> to vector<8x784xf32>
    %22 = arith.addf %19, %21 : vector<8x784xf32>
    %cst_17 = arith.constant 0.000000e+00 : f32
    %23 = vector.broadcast %cst_17 : f32 to vector<8x784xf32>
    %24 = arith.subf %23, %22 : vector<8x784xf32>
    %25 = math.exp %24 : vector<8x784xf32>
    %cst_18 = arith.constant 1.000000e+00 : f32
    %26 = vector.broadcast %cst_18 : f32 to vector<8x784xf32>
    %27 = arith.addf %26, %25 : vector<8x784xf32>
    %28 = tpu.reciprocal %27 {approx = true} : vector<8x784xf32> -> vector<8x784xf32>
    %c0_19 = arith.constant 0 : index
    %c0_20 = arith.constant 0 : index
    %29 = vector.load %arg8[%c0_19, %c0_20] : memref<8x784xf32, #tpu.memory_space<vmem>>, vector<8x784xf32>
    tpu.vector_store %arg8[%c0_19, %c0_20], %28 {strides = array<i32>} : memref<8x784xf32, #tpu.memory_space<vmem>>, vector<8x784xf32>,
    return
  }
  func.func @transform_0(%arg0: i32) -> (i32, i32) {
    %c0_i32 = arith.constant 0 : i32
    %c0_i32_0 = arith.constant 0 : i32
    return %arg0, %c0_i32 : i32, i32
  }
  func.func @transform_1(%arg0: i32) -> (i32, i32) {
    %c0_i32 = arith.constant 0 : i32
    %c0_i32_0 = arith.constant 0 : i32
    %c0_i32_1 = arith.constant 0 : i32
    return %c0_i32, %c0_i32_0 : i32, i32
  }
  func.func @transform_2(%arg0: i32) -> (i32, i32) {
    %c0_i32 = arith.constant 0 : i32
    %c0_i32_0 = arith.constant 0 : i32
    %c0_i32_1 = arith.constant 0 : i32
    return %c0_i32, %c0_i32_0 : i32, i32
  }
  func.func @transform_3(%arg0: i32) -> (i32, i32) {
    %c0_i32 = arith.constant 0 : i32
    %c0_i32_0 = arith.constant 0 : i32
    %c0_i32_1 = arith.constant 0 : i32
    return %c0_i32, %c0_i32_0 : i32, i32
  }
  func.func @transform_4(%arg0: i32) -> (i32, i32) {
    %c0_i32 = arith.constant 0 : i32
    %c0_i32_0 = arith.constant 0 : i32
    %c0_i32_1 = arith.constant 0 : i32
    return %c0_i32, %c0_i32_0 : i32, i32
  }
  func.func @transform_5(%arg0: i32) -> (i32, i32) {
    %c0_i32 = arith.constant 0 : i32
    %c0_i32_0 = arith.constant 0 : i32
    %c0_i32_1 = arith.constant 0 : i32
    return %c0_i32, %c0_i32_0 : i32, i32
  }
  func.func @transform_6(%arg0: i32) -> (i32, i32) {
    %c0_i32 = arith.constant 0 : i32
    %c0_i32_0 = arith.constant 0 : i32
    %c0_i32_1 = arith.constant 0 : i32
    return %c0_i32, %c0_i32_0 : i32, i32
  }
  func.func @transform_7(%arg0: i32) -> (i32, i32) {
    %c0_i32 = arith.constant 0 : i32
    %c0_i32_0 = arith.constant 0 : i32
    return %arg0, %c0_i32 : i32, i32
  }
}

</mosaic_0001>

<llo_original>
// kernel: tpu_custom_call.1
$region0: #{tpu_custom_call.1}
  #allocation0 [shape = 'u32[]', space=smem, size = 0x4, offset = 0x4, fixed_abs, tag = 'smem constant byte address 0x4 - core index']
  #allocation1 [shape = 'u32[144,128]{1,0:T(1,128)}', space=vmem, size = 0x12000, scoped, tag = 'internal scratch']
  %s0 = inlined_call_operand.vmem [shape: f32[8,784], index: 0, kind: input, shape index: {}]
  %s1 = inlined_call_operand.vmem [shape: bf16[784,128], index: 1, kind: input, shape index: {}]
  %s2 = inlined_call_operand.vmem [shape: f32[1,128], index: 2, kind: input, shape index: {}]
  %s3 = inlined_call_operand.vmem [shape: bf16[128,128], index: 3, kind: input, shape index: {}]
  %s4 = inlined_call_operand.vmem [shape: f32[1,128], index: 4, kind: input, shape index: {}]
  %s5 = inlined_call_operand.vmem [shape: bf16[128,784], index: 5, kind: input, shape index: {}]
  %s6 = inlined_call_operand.vmem [shape: f32[1,784], index: 6, kind: input, shape index: {}]
  %s7 = inlined_call_operand.hbm [shape: f32[8,784], index: 7, kind: output, shape index: {}]
  %s8 = sld [smem:[#allocation0]]
  $region38: #{tpu_custom_call.1} parent=0
    _
  %s10 = ssub.s32 1, %s8
  %s11 = scalar_select 0, %s10, %s8
  $region1: #{tpu_custom_call.1} parent=0
    #allocation2 [shape = 'u8[28672]{0}', space=vmem, size = 0x7000, scoped, tag = 'output window, operand 0, single buffered']
    #allocation3 [shape = 's32[1]{0}', space=sflag, size = 0x4, scoped, tag = 'scoped memory for tpu_custom_call.1']
    %12 = vsyncpa [#allocation3], 0
    // Predicated region
    $region2: #{tpu_custom_call.1} parent=1 // pred_check
      _
    $region3: #{tpu_custom_call.1} parent=1 // pred_check_branch
      %14 = sbr.rel (0) target = $region5
    $region4: #{tpu_custom_call.1} parent=1 // pred_region
      _
    $region5: #{tpu_custom_call.1} parent=1 // pred_fallthru
      _
    // Predicated region
    $region6: #{tpu_custom_call.1} parent=1 // pred_check
      _
    $region7: #{tpu_custom_call.1} parent=1 // pred_check_branch
      %16 = sbr.rel (0) target = $region9
    $region8: #{tpu_custom_call.1} parent=1 // pred_region
      _
    $region9: #{tpu_custom_call.1} parent=1 // pred_fallthru
      _
    // Predicated region
    $region10: #{tpu_custom_call.1} parent=1 // pred_check
      _
    $region11: #{tpu_custom_call.1} parent=1 // pred_check_branch
      %18 = sbr.rel (0) target = $region13
    $region12: #{tpu_custom_call.1} parent=1 // pred_region
      _
    $region13: #{tpu_custom_call.1} parent=1 // pred_fallthru
      _
    // Predicated region
    $region14: #{tpu_custom_call.1} parent=1 // pred_check
      _
    $region15: #{tpu_custom_call.1} parent=1 // pred_check_branch
      %20 = sbr.rel (0) target = $region17
    $region16: #{tpu_custom_call.1} parent=1 // pred_region
      _
    $region17: #{tpu_custom_call.1} parent=1 // pred_fallthru
      _
    // Predicated region
    $region18: #{tpu_custom_call.1} parent=1 // pred_check
      _
    $region19: #{tpu_custom_call.1} parent=1 // pred_check_branch
      %22 = sbr.rel (0) target = $region21
    $region20: #{tpu_custom_call.1} parent=1 // pred_region
      _
    $region21: #{tpu_custom_call.1} parent=1 // pred_fallthru
      _
    // Predicated region
    $region22: #{tpu_custom_call.1} parent=1 // pred_check
      _
    $region23: #{tpu_custom_call.1} parent=1 // pred_check_branch
      %24 = sbr.rel (0) target = $region25
    $region24: #{tpu_custom_call.1} parent=1 // pred_region
      _
    $region25: #{tpu_custom_call.1} parent=1 // pred_fallthru
      _
    // Predicated region
    $region26: #{tpu_custom_call.1} parent=1 // pred_check
      _
    $region27: #{tpu_custom_call.1} parent=1 // pred_check_branch
      %26 = sbr.rel (0) target = $region29
    $region28: #{tpu_custom_call.1} parent=1 // pred_region
      _
    $region29: #{tpu_custom_call.1} parent=1 // pred_fallthru
      _
    %v28 = vld [vmem:[%s0] sm:$0xff]
    %v29 = vld [vmem:[%s0 + $0x8] sm:$0xff]
    %v30 = vld [vmem:[%s0 + $0x10] sm:$0xff]
    %v31 = vld [vmem:[%s0 + $0x18] sm:$0xff]
    %v32 = vld [vmem:[%s0 + $0x20] sm:$0xff]
    %v33 = vld [vmem:[%s0 + $0x28] sm:$0xff]
    %v34 = vld [vmem:[%s0 + $0x30] sm:$0xff]
    %v35 = vpack.c.bf16 %v28, %v28
    %v36 = vpack.c.bf16 %v29, %v29
    %v37 = vpack.c.bf16 %v30, %v30
    %v38 = vpack.c.bf16 %v31, %v31
    %v39 = vpack.c.bf16 %v32, %v32
    %v40 = vpack.c.bf16 %v33, %v33
    %v41 = vpack.c.bf16 %v34, %v34
    %v42 = vld [vmem:[%s1] sm:$0xf]
    %v43 = vld [vmem:[%s1 + $0x4] sm:$0xf]
    %v44 = vld [vmem:[%s1 + $0x8] sm:$0xf]
    %v45 = vld [vmem:[%s1 + $0xc] sm:$0xf]
    %v46 = vld [vmem:[%s1 + $0x10] sm:$0xf]
    %v47 = vld [vmem:[%s1 + $0x14] sm:$0xf]
    %v48 = vld [vmem:[%s1 + $0x18] sm:$0xf]
    %v49 = vld [vmem:[%s1 + $0x1c] sm:$0xf]
    %v50 = vld [vmem:[%s1 + $0x20] sm:$0xf]
    %v51 = vld [vmem:[%s1 + $0x24] sm:$0xf]
    %v52 = vld [vmem:[%s1 + $0x28] sm:$0xf]
    %v53 = vld [vmem:[%s1 + $0x2c] sm:$0xf]
    %v54 = vld [vmem:[%s1 + $0x30] sm:$0xf]
    %v55 = vld [vmem:[%s1 + $0x34] sm:$0xf]
    %v56 = vld [vmem:[%s1 + $0x38] sm:$0xf]
    %v57 = vld [vmem:[%s1 + $0x3c] sm:$0xf]
    %v58 = vld [vmem:[%s1 + $0x40] sm:$0xf]
    %v59 = vld [vmem:[%s1 + $0x44] sm:$0xf]
    %v60 = vld [vmem:[%s1 + $0x48] sm:$0xf]
    %v61 = vld [vmem:[%s1 + $0x4c] sm:$0xf]
    %v62 = vld [vmem:[%s1 + $0x50] sm:$0xf]
    %v63 = vld [vmem:[%s1 + $0x54] sm:$0xf]
    %v64 = vld [vmem:[%s1 + $0x58] sm:$0xf]
    %v65 = vld [vmem:[%s1 + $0x5c] sm:$0xf]
    %v66 = vld [vmem:[%s1 + $0x60] sm:$0xf]
    %v67 = vld [vmem:[%s1 + $0x64] sm:$0xf]
    %v68 = vld [vmem:[%s1 + $0x68] sm:$0xf]
    %v69 = vld [vmem:[%s1 + $0x6c] sm:$0xf]
    %v70 = vld [vmem:[%s1 + $0x70] sm:$0xf]
    %v71 = vld [vmem:[%s1 + $0x74] sm:$0xf]
    %v72 = vld [vmem:[%s1 + $0x78] sm:$0xf]
    %v73 = vld [vmem:[%s1 + $0x7c] sm:$0xf]
    %v74 = vld [vmem:[%s1 + $0x80] sm:$0xf]
    %v75 = vld [vmem:[%s1 + $0x84] sm:$0xf]
    %v76 = vld [vmem:[%s1 + $0x88] sm:$0xf]
    %v77 = vld [vmem:[%s1 + $0x8c] sm:$0xf]
    %v78 = vld [vmem:[%s1 + $0x90] sm:$0xf]
    %v79 = vld [vmem:[%s1 + $0x94] sm:$0xf]
    %v80 = vld [vmem:[%s1 + $0x98] sm:$0xf]
    %v81 = vld [vmem:[%s1 + $0x9c] sm:$0xf]
    %v82 = vld [vmem:[%s1 + $0xa0] sm:$0xf]
    %v83 = vld [vmem:[%s1 + $0xa4] sm:$0xf]
    %v84 = vld [vmem:[%s1 + $0xa8] sm:$0xf]
    %v85 = vld [vmem:[%s1 + $0xac] sm:$0xf]
    %v86 = vld [vmem:[%s1 + $0xb0] sm:$0xf]
    %v87 = vld [vmem:[%s1 + $0xb4] sm:$0xf]
    %v88 = vld [vmem:[%s1 + $0xb8] sm:$0xf]
    %v89 = vld [vmem:[%s1 + $0xbc] sm:$0xf]
    %v90 = vld [vmem:[%s1 + $0xc0] sm:$0xf]
    %v91 = vld [vmem:[%s1 + $0xc4] sm:$0xf]
    %v92 = vld [vmem:[%s1 + $0xc8] sm:$0xf]
    %v93 = vld [vmem:[%s1 + $0xcc] sm:$0xf]
    %v94 = vld [vmem:[%s1 + $0xd0] sm:$0xf]
    %v95 = vld [vmem:[%s1 + $0xd4] sm:$0xf]
    %v96 = vld [vmem:[%s1 + $0xd8] sm:$0xf]
    %v97 = vld [vmem:[%s1 + $0xdc] sm:$0xf]
    %v98 = vld [vmem:[%s1 + $0xe0] sm:$0xf]
    %v99 = vld [vmem:[%s1 + $0xe4] sm:$0xf]
    %v100 = vld [vmem:[%s1 + $0xe8] sm:$0xf]
    %v101 = vld [vmem:[%s1 + $0xec] sm:$0xf]
    %v102 = vld [vmem:[%s1 + $0xf0] sm:$0xf]
    %v103 = vld [vmem:[%s1 + $0xf4] sm:$0xf]
    %v104 = vld [vmem:[%s1 + $0xf8] sm:$0xf]
    %v105 = vld [vmem:[%s1 + $0xfc] sm:$0xf]
    %v106 = vld [vmem:[%s1 + $0x100] sm:$0xf]
    %v107 = vld [vmem:[%s1 + $0x104] sm:$0xf]
    %v108 = vld [vmem:[%s1 + $0x108] sm:$0xf]
    %v109 = vld [vmem:[%s1 + $0x10c] sm:$0xf]
    %v110 = vld [vmem:[%s1 + $0x110] sm:$0xf]
    %v111 = vld [vmem:[%s1 + $0x114] sm:$0xf]
    %v112 = vld [vmem:[%s1 + $0x118] sm:$0xf]
    %v113 = vld [vmem:[%s1 + $0x11c] sm:$0xf]
    %v114 = vld [vmem:[%s1 + $0x120] sm:$0xf]
    %v115 = vld [vmem:[%s1 + $0x124] sm:$0xf]
    %v116 = vld [vmem:[%s1 + $0x128] sm:$0xf]
    %v117 = vld [vmem:[%s1 + $0x12c] sm:$0xf]
    %v118 = vld [vmem:[%s1 + $0x130] sm:$0xf]
    %v119 = vld [vmem:[%s1 + $0x134] sm:$0xf]
    %v120 = vld [vmem:[%s1 + $0x138] sm:$0xf]
    %v121 = vld [vmem:[%s1 + $0x13c] sm:$0xf]
    %v122 = vld [vmem:[%s1 + $0x140] sm:$0xf]
    %v123 = vld [vmem:[%s1 + $0x144] sm:$0xf]
    %v124 = vld [vmem:[%s1 + $0x148] sm:$0xf]
    %v125 = vld [vmem:[%s1 + $0x14c] sm:$0xf]
    %v126 = vld [vmem:[%s1 + $0x150] sm:$0xf]
    %v127 = vld [vmem:[%s1 + $0x154] sm:$0xf]
    %v128 = vld [vmem:[%s1 + $0x158] sm:$0xf]
    %v129 = vld [vmem:[%s1 + $0x15c] sm:$0xf]
    %v130 = vld [vmem:[%s1 + $0x160] sm:$0xf]
    %v131 = vld [vmem:[%s1 + $0x164] sm:$0xf]
    %v132 = vld [vmem:[%s1 + $0x168] sm:$0xf]
    %v133 = vld [vmem:[%s1 + $0x16c] sm:$0xf]
    %v134 = vld [vmem:[%s1 + $0x170] sm:$0xf]
    %v135 = vld [vmem:[%s1 + $0x174] sm:$0xf]
    %v136 = vld [vmem:[%s1 + $0x178] sm:$0xf]
    %v137 = vld [vmem:[%s1 + $0x17c] sm:$0xf]
    %v138 = vld [vmem:[%s1 + $0x180] sm:$0xf]
    %v139 = vld [vmem:[%s1 + $0x184] sm:$0xf]
    %v140 = vld [vmem:[%s2] sm:$0x1]
    %v142 = vlaneseq
    %v143 = vshrl.u32 %v142, 7
    %v144 = vsub.s32 0, %v143
    %v145 = vrot.slane %v140, %v144
    %v245 = vunpack.c.l.b16 %v42
    %v246 = vunpack.c.l.b16 %v43
    %v247 = vunpack.c.l.b16 %v44
    %v248 = vunpack.c.l.b16 %v45
    %v249 = vunpack.c.l.b16 %v46
    %v250 = vunpack.c.l.b16 %v47
    %v251 = vunpack.c.l.b16 %v48
    %v252 = vunpack.c.l.b16 %v49
    %v253 = vunpack.c.l.b16 %v50
    %v254 = vunpack.c.l.b16 %v51
    %v255 = vunpack.c.l.b16 %v52
    %v256 = vunpack.c.l.b16 %v53
    %v257 = vunpack.c.l.b16 %v54
    %v258 = vunpack.c.l.b16 %v55
    %v259 = vunpack.c.l.b16 %v56
    %v260 = vunpack.c.l.b16 %v57
    %v261 = vunpack.c.l.b16 %v58
    %v262 = vunpack.c.l.b16 %v59
    %v263 = vunpack.c.l.b16 %v60
    %v264 = vunpack.c.l.b16 %v61
    %v265 = vunpack.c.l.b16 %v62
    %v266 = vunpack.c.l.b16 %v63
    %v267 = vunpack.c.l.b16 %v64
    %v268 = vunpack.c.l.b16 %v65
    %v269 = vunpack.c.l.b16 %v66
    %v270 = vunpack.c.l.b16 %v67
    %v271 = vunpack.c.l.b16 %v68
    %v272 = vunpack.c.l.b16 %v69
    %v273 = vunpack.c.l.b16 %v70
    %v274 = vunpack.c.l.b16 %v71
    %v275 = vunpack.c.l.b16 %v72
    %v276 = vunpack.c.l.b16 %v73
    %v277 = vunpack.c.l.b16 %v74
    %v278 = vunpack.c.l.b16 %v75
    %v279 = vunpack.c.l.b16 %v76
    %v280 = vunpack.c.l.b16 %v77
    %v281 = vunpack.c.l.b16 %v78
    %v282 = vunpack.c.l.b16 %v79
    %v283 = vunpack.c.l.b16 %v80
    %v284 = vunpack.c.l.b16 %v81
    %v285 = vunpack.c.l.b16 %v82
    %v286 = vunpack.c.l.b16 %v83
    %v287 = vunpack.c.l.b16 %v84
    %v288 = vunpack.c.l.b16 %v85
    %v289 = vunpack.c.l.b16 %v86
    %v290 = vunpack.c.l.b16 %v87
    %v291 = vunpack.c.l.b16 %v88
    %v292 = vunpack.c.l.b16 %v89
    %v293 = vunpack.c.l.b16 %v90
    %v294 = vunpack.c.l.b16 %v91
    %v295 = vunpack.c.l.b16 %v92
    %v296 = vunpack.c.l.b16 %v93
    %v297 = vunpack.c.l.b16 %v94
    %v298 = vunpack.c.l.b16 %v95
    %v299 = vunpack.c.l.b16 %v96
    %v300 = vunpack.c.l.b16 %v97
    %v301 = vunpack.c.l.b16 %v98
    %v302 = vunpack.c.l.b16 %v99
    %v303 = vunpack.c.l.b16 %v100
    %v304 = vunpack.c.l.b16 %v101
    %v305 = vunpack.c.l.b16 %v102
    %v306 = vunpack.c.l.b16 %v103
    %v307 = vunpack.c.l.b16 %v104
    %v308 = vunpack.c.l.b16 %v105
    %v309 = vunpack.c.l.b16 %v106
    %v310 = vunpack.c.l.b16 %v107
    %v311 = vunpack.c.l.b16 %v108
    %v312 = vunpack.c.l.b16 %v109
    %v313 = vunpack.c.l.b16 %v110
    %v314 = vunpack.c.l.b16 %v111
    %v315 = vunpack.c.l.b16 %v112
    %v316 = vunpack.c.l.b16 %v113
    %v317 = vunpack.c.l.b16 %v114
    %v318 = vunpack.c.l.b16 %v115
    %v319 = vunpack.c.l.b16 %v116
    %v320 = vunpack.c.l.b16 %v117
    %v321 = vunpack.c.l.b16 %v118
    %v322 = vunpack.c.l.b16 %v119
    %v323 = vunpack.c.l.b16 %v120
    %v324 = vunpack.c.l.b16 %v121
    %v325 = vunpack.c.l.b16 %v122
    %v326 = vunpack.c.l.b16 %v123
    %v327 = vunpack.c.l.b16 %v124
    %v328 = vunpack.c.l.b16 %v125
    %v329 = vunpack.c.l.b16 %v126
    %v330 = vunpack.c.l.b16 %v127
    %v331 = vunpack.c.l.b16 %v128
    %v332 = vunpack.c.l.b16 %v129
    %v333 = vunpack.c.l.b16 %v130
    %v334 = vunpack.c.l.b16 %v131
    %v335 = vunpack.c.l.b16 %v132
    %v336 = vunpack.c.l.b16 %v133
    %v337 = vunpack.c.l.b16 %v134
    %v338 = vunpack.c.l.b16 %v135
    %v339 = vunpack.c.l.b16 %v136
    %v340 = vunpack.c.l.b16 %v137
    %v341 = vunpack.c.l.b16 %v138
    %v342 = vunpack.c.l.b16 %v139
    %v343 = vpack.c.b16 %v246, %v245
    %v344 = vpack.c.b16 %v248, %v247
    %v345 = vpack.c.b16 %v250, %v249
    %v346 = vpack.c.b16 %v252, %v251
    %v347 = vpack.c.b16 %v254, %v253
    %v348 = vpack.c.b16 %v256, %v255
    %v349 = vpack.c.b16 %v258, %v257
    %v350 = vpack.c.b16 %v260, %v259
    %v351 = vpack.c.b16 %v262, %v261
    %v352 = vpack.c.b16 %v264, %v263
    %v353 = vpack.c.b16 %v266, %v265
    %v354 = vpack.c.b16 %v268, %v267
    %v355 = vpack.c.b16 %v270, %v269
    %v356 = vpack.c.b16 %v272, %v271
    %v357 = vpack.c.b16 %v274, %v273
    %v358 = vpack.c.b16 %v276, %v275
    %v359 = vpack.c.b16 %v278, %v277
    %v360 = vpack.c.b16 %v280, %v279
    %v361 = vpack.c.b16 %v282, %v281
    %v362 = vpack.c.b16 %v284, %v283
    %v363 = vpack.c.b16 %v286, %v285
    %v364 = vpack.c.b16 %v288, %v287
    %v365 = vpack.c.b16 %v290, %v289
    %v366 = vpack.c.b16 %v292, %v291
    %v367 = vpack.c.b16 %v294, %v293
    %v368 = vpack.c.b16 %v296, %v295
    %v369 = vpack.c.b16 %v298, %v297
    %v370 = vpack.c.b16 %v300, %v299
    %v371 = vpack.c.b16 %v302, %v301
    %v372 = vpack.c.b16 %v304, %v303
    %v373 = vpack.c.b16 %v306, %v305
    %v374 = vpack.c.b16 %v308, %v307
    %v375 = vpack.c.b16 %v310, %v309
    %v376 = vpack.c.b16 %v312, %v311
    %v377 = vpack.c.b16 %v314, %v313
    %v378 = vpack.c.b16 %v316, %v315
    %v379 = vpack.c.b16 %v318, %v317
    %v380 = vpack.c.b16 %v320, %v319
    %v381 = vpack.c.b16 %v322, %v321
    %v382 = vpack.c.b16 %v324, %v323
    %v383 = vpack.c.b16 %v326, %v325
    %v384 = vpack.c.b16 %v328, %v327
    %v385 = vpack.c.b16 %v330, %v329
    %v386 = vpack.c.b16 %v332, %v331
    %v387 = vpack.c.b16 %v334, %v333
    %v388 = vpack.c.b16 %v336, %v335
    %v389 = vpack.c.b16 %v338, %v337
    %v390 = vpack.c.b16 %v340, %v339
    %v391 = vpack.c.b16 %v342, %v341
    %vm441 = vcmask 130048
    %v443 = vsel %vm441, %v41, 0
    %445 = vmatprep.subr.bf16.mxu0 0
    %446 = vmatpush1.bf16.msra.mxu0 %v350
    %447 = vmatprep.subr.bf16.mxu0 0
    %448 = vmatpush1.bf16.msra.mxu0 %v349
    %449 = vmatprep.subr.bf16.mxu0 0
    %450 = vmatpush1.bf16.msra.mxu0 %v348
    %451 = vmatprep.subr.bf16.mxu0 0
    %452 = vmatpush1.bf16.msra.mxu0 %v347
    %453 = vmatprep.subr.bf16.mxu0 0
    %454 = vmatpush1.bf16.msra.mxu0 %v346
    %455 = vmatprep.subr.bf16.mxu0 0
    %456 = vmatpush1.bf16.msra.mxu0 %v345
    %457 = vmatprep.subr.bf16.mxu0 0
    %458 = vmatpush1.bf16.msra.mxu0 %v344
    %459 = vmatprep.subr.bf16.mxu0 0
    %460 = vmatpush1.bf16.msra.mxu0 %v343
    %461 = vmatprep.subr.bf16.mxu0 0
    %462 = vmatpush2.bf16.msra.mxu0 %v358
    %463 = vmatprep.subr.bf16.mxu0 0
    %464 = vmatpush2.bf16.msra.mxu0 %v357
    %465 = vmatprep.subr.bf16.mxu0 0
    %466 = vmatpush2.bf16.msra.mxu0 %v356
    %467 = vmatprep.subr.bf16.mxu0 0
    %468 = vmatpush2.bf16.msra.mxu0 %v355
    %469 = vmatprep.subr.bf16.mxu0 0
    %470 = vmatpush2.bf16.msra.mxu0 %v354
    %471 = vmatprep.subr.bf16.mxu0 0
    %472 = vmatpush2.bf16.msra.mxu0 %v353
    %473 = vmatprep.subr.bf16.mxu0 0
    %474 = vmatpush2.bf16.msra.mxu0 %v352
    %475 = vmatprep.subr.bf16.mxu0 0
    %476 = vmatpush2.bf16.msra.mxu0 %v351
    %477 = vmatprep.mubr.bf16.mxu0 %v36
    %478 = vmatmul.mubr.bf16.gmra.mxu0 %v35
    %v479 = vpop.f32.mrf.mxu0
    %v480 = vadd.f32 %v145, %v479
    %v481 = vpop.f32.mrf.mxu0
    %v482 = vpop.f32.mrf.mxu0
    %v483 = vpop.f32.mrf.mxu0
    %484 = vdwg.mxu0
    %485 = vmatprep.subr.bf16.mxu0 0
    %486 = vmatpush1.bf16.msra.mxu0 %v366
    %487 = vmatprep.subr.bf16.mxu0 0
    %488 = vmatpush1.bf16.msra.mxu0 %v365
    %489 = vmatprep.subr.bf16.mxu0 0
    %490 = vmatpush1.bf16.msra.mxu0 %v364
    %491 = vmatprep.subr.bf16.mxu0 0
    %492 = vmatpush1.bf16.msra.mxu0 %v363
    %493 = vmatprep.subr.bf16.mxu0 0
    %494 = vmatpush1.bf16.msra.mxu0 %v362
    %495 = vmatprep.subr.bf16.mxu0 0
    %496 = vmatpush1.bf16.msra.mxu0 %v361
    %497 = vmatprep.subr.bf16.mxu0 0
    %498 = vmatpush1.bf16.msra.mxu0 %v360
    %499 = vmatprep.subr.bf16.mxu0 0
    %500 = vmatpush1.bf16.msra.mxu0 %v359
    %501 = vmatprep.subr.bf16.mxu0 0
    %502 = vmatpush2.bf16.msra.mxu0 %v374
    %503 = vmatprep.subr.bf16.mxu0 0
    %504 = vmatpush2.bf16.msra.mxu0 %v373
    %505 = vmatprep.subr.bf16.mxu0 0
    %506 = vmatpush2.bf16.msra.mxu0 %v372
    %507 = vmatprep.subr.bf16.mxu0 0
    %508 = vmatpush2.bf16.msra.mxu0 %v371
    %509 = vmatprep.subr.bf16.mxu0 0
    %510 = vmatpush2.bf16.msra.mxu0 %v370
    %511 = vmatprep.subr.bf16.mxu0 0
    %512 = vmatpush2.bf16.msra.mxu0 %v369
    %513 = vmatprep.subr.bf16.mxu0 0
    %514 = vmatpush2.bf16.msra.mxu0 %v368
    %515 = vmatprep.subr.bf16.mxu0 0
    %516 = vmatpush2.bf16.msra.mxu0 %v367
    %517 = vmatprep.mubr.bf16.mxu0 %v38
    %518 = vmatmul.mubr.bf16.gmra.mxu0 %v37
    %v519 = vpop.f32.mrf.mxu0
    %v520 = vadd.f32 %v480, %v519
    %v521 = vpop.f32.mrf.mxu0
    %v522 = vpop.f32.mrf.mxu0
    %v523 = vpop.f32.mrf.mxu0
    %524 = vdwg.mxu0
    %525 = vmatprep.subr.bf16.mxu0 0
    %526 = vmatpush1.bf16.msra.mxu0 %v382
    %527 = vmatprep.subr.bf16.mxu0 0
    %528 = vmatpush1.bf16.msra.mxu0 %v381
    %529 = vmatprep.subr.bf16.mxu0 0
    %530 = vmatpush1.bf16.msra.mxu0 %v380
    %531 = vmatprep.subr.bf16.mxu0 0
    %532 = vmatpush1.bf16.msra.mxu0 %v379
    %533 = vmatprep.subr.bf16.mxu0 0
    %534 = vmatpush1.bf16.msra.mxu0 %v378
    %535 = vmatprep.subr.bf16.mxu0 0
    %536 = vmatpush1.bf16.msra.mxu0 %v377
    %537 = vmatprep.subr.bf16.mxu0 0
    %538 = vmatpush1.bf16.msra.mxu0 %v376
    %539 = vmatprep.subr.bf16.mxu0 0
    %540 = vmatpush1.bf16.msra.mxu0 %v375
    %541 = vmatprep.subr.bf16.mxu0 0
    %542 = vmatpush2.bf16.msra.mxu0 %v390
    %543 = vmatprep.subr.bf16.mxu0 0
    %544 = vmatpush2.bf16.msra.mxu0 %v389
    %545 = vmatprep.subr.bf16.mxu0 0
    %546 = vmatpush2.bf16.msra.mxu0 %v388
    %547 = vmatprep.subr.bf16.mxu0 0
    %548 = vmatpush2.bf16.msra.mxu0 %v387
    %549 = vmatprep.subr.bf16.mxu0 0
    %550 = vmatpush2.bf16.msra.mxu0 %v386
    %551 = vmatprep.subr.bf16.mxu0 0
    %552 = vmatpush2.bf16.msra.mxu0 %v385
    %553 = vmatprep.subr.bf16.mxu0 0
    %554 = vmatpush2.bf16.msra.mxu0 %v384
    %555 = vmatprep.subr.bf16.mxu0 0
    %556 = vmatpush2.bf16.msra.mxu0 %v383
    %557 = vmatprep.mubr.bf16.mxu0 %v40
    %558 = vmatmul.mubr.bf16.gmra.mxu0 %v39
    %v559 = vpop.f32.mrf.mxu0
    %v560 = vadd.f32 %v520, %v559
    %v561 = vpop.f32.mrf.mxu0
    %v562 = vpop.f32.mrf.mxu0
    %v563 = vpop.f32.mrf.mxu0
    %564 = vdwg.mxu0
    %565 = vmatprep.subr.bf16.mxu0 0
    %566 = vmatpush1.bf16.msra.mxu0 0
    %567 = vmatprep.subr.bf16.mxu0 0
    %568 = vmatpush1.bf16.msra.mxu0 0
    %569 = vmatprep.subr.bf16.mxu0 0
    %570 = vmatpush1.bf16.msra.mxu0 0
    %571 = vmatprep.subr.bf16.mxu0 0
    %572 = vmatpush1.bf16.msra.mxu0 0
    %573 = vmatprep.subr.bf16.mxu0 0
    %574 = vmatpush1.bf16.msra.mxu0 0
    %575 = vmatprep.subr.bf16.mxu0 0
    %576 = vmatpush1.bf16.msra.mxu0 0
    %577 = vmatprep.subr.bf16.mxu0 0
    %578 = vmatpush1.bf16.msra.mxu0 0
    %579 = vmatprep.subr.bf16.mxu0 0
    %580 = vmatpush1.bf16.msra.mxu0 %v391
    %581 = vmatprep.subr.bf16.mxu0 0
    %582 = vmatpush2.bf16.msra.mxu0 0
    %583 = vmatprep.subr.bf16.mxu0 0
    %584 = vmatpush2.bf16.msra.mxu0 0
    %585 = vmatprep.subr.bf16.mxu0 0
    %586 = vmatpush2.bf16.msra.mxu0 0
    %587 = vmatprep.subr.bf16.mxu0 0
    %588 = vmatpush2.bf16.msra.mxu0 0
    %589 = vmatprep.subr.bf16.mxu0 0
    %590 = vmatpush2.bf16.msra.mxu0 0
    %591 = vmatprep.subr.bf16.mxu0 0
    %592 = vmatpush2.bf16.msra.mxu0 0
    %593 = vmatprep.subr.bf16.mxu0 0
    %594 = vmatpush2.bf16.msra.mxu0 0
    %595 = vmatprep.subr.bf16.mxu0 0
    %596 = vmatpush2.bf16.msra.mxu0 0
    %597 = vmatprep.mubr.bf16.mxu0 0
    %598 = vmatmul.mubr.bf16.gmra.mxu0 %v443
    %v599 = vpop.f32.mrf.mxu0
    %v600 = vadd.f32 %v560, %v599
    %v601 = vpop.f32.mrf.mxu0
    %v602 = vpop.f32.mrf.mxu0
    %v603 = vpop.f32.mrf.mxu0
    %604 = vdwg.mxu0
    %v605 = vmax.f32 %v600, 0.0
    %v606 = vpack.c.bf16 %v605, %v605
    %v607 = vld [vmem:[%s3] sm:$0xf]
    %v608 = vld [vmem:[%s3 + $0x4] sm:$0xf]
    %v609 = vld [vmem:[%s3 + $0x8] sm:$0xf]
    %v610 = vld [vmem:[%s3 + $0xc] sm:$0xf]
    %v611 = vld [vmem:[%s3 + $0x10] sm:$0xf]
    %v612 = vld [vmem:[%s3 + $0x14] sm:$0xf]
    %v613 = vld [vmem:[%s3 + $0x18] sm:$0xf]
    %v614 = vld [vmem:[%s3 + $0x1c] sm:$0xf]
    %v615 = vld [vmem:[%s3 + $0x20] sm:$0xf]
    %v616 = vld [vmem:[%s3 + $0x24] sm:$0xf]
    %v617 = vld [vmem:[%s3 + $0x28] sm:$0xf]
    %v618 = vld [vmem:[%s3 + $0x2c] sm:$0xf]
    %v619 = vld [vmem:[%s3 + $0x30] sm:$0xf]
    %v620 = vld [vmem:[%s3 + $0x34] sm:$0xf]
    %v621 = vld [vmem:[%s3 + $0x38] sm:$0xf]
    %v622 = vld [vmem:[%s3 + $0x3c] sm:$0xf]
    %v623 = vld [vmem:[%s4] sm:$0x1]
    %v625 = vlaneseq
    %v626 = vshrl.u32 %v625, 7
    %v627 = vsub.s32 0, %v626
    %v628 = vrot.slane %v623, %v627
    %v646 = vunpack.c.l.b16 %v607
    %v647 = vunpack.c.l.b16 %v608
    %v648 = vunpack.c.l.b16 %v609
    %v649 = vunpack.c.l.b16 %v610
    %v650 = vunpack.c.l.b16 %v611
    %v651 = vunpack.c.l.b16 %v612
    %v652 = vunpack.c.l.b16 %v613
    %v653 = vunpack.c.l.b16 %v614
    %v654 = vunpack.c.l.b16 %v615
    %v655 = vunpack.c.l.b16 %v616
    %v656 = vunpack.c.l.b16 %v617
    %v657 = vunpack.c.l.b16 %v618
    %v658 = vunpack.c.l.b16 %v619
    %v659 = vunpack.c.l.b16 %v620
    %v660 = vunpack.c.l.b16 %v621
    %v661 = vunpack.c.l.b16 %v622
    %v662 = vpack.c.b16 %v647, %v646
    %v663 = vpack.c.b16 %v649, %v648
    %v664 = vpack.c.b16 %v651, %v650
    %v665 = vpack.c.b16 %v653, %v652
    %v666 = vpack.c.b16 %v655, %v654
    %v667 = vpack.c.b16 %v657, %v656
    %v668 = vpack.c.b16 %v659, %v658
    %v669 = vpack.c.b16 %v661, %v660
    %678 = vmatprep.subr.bf16.mxu0 0
    %679 = vmatpush1.bf16.msra.mxu0 %v669
    %680 = vmatprep.subr.bf16.mxu0 0
    %681 = vmatpush1.bf16.msra.mxu0 %v668
    %682 = vmatprep.subr.bf16.mxu0 0
    %683 = vmatpush1.bf16.msra.mxu0 %v667
    %684 = vmatprep.subr.bf16.mxu0 0
    %685 = vmatpush1.bf16.msra.mxu0 %v666
    %686 = vmatprep.subr.bf16.mxu0 0
    %687 = vmatpush1.bf16.msra.mxu0 %v665
    %688 = vmatprep.subr.bf16.mxu0 0
    %689 = vmatpush1.bf16.msra.mxu0 %v664
    %690 = vmatprep.subr.bf16.mxu0 0
    %691 = vmatpush1.bf16.msra.mxu0 %v663
    %692 = vmatprep.subr.bf16.mxu0 0
    %693 = vmatpush1.bf16.msra.mxu0 %v662
    %694 = vmatprep.subr.bf16.mxu0 0
    %695 = vmatpush2.bf16.msra.mxu0 0
    %696 = vmatprep.subr.bf16.mxu0 0
    %697 = vmatpush2.bf16.msra.mxu0 0
    %698 = vmatprep.subr.bf16.mxu0 0
    %699 = vmatpush2.bf16.msra.mxu0 0
    %700 = vmatprep.subr.bf16.mxu0 0
    %701 = vmatpush2.bf16.msra.mxu0 0
    %702 = vmatprep.subr.bf16.mxu0 0
    %703 = vmatpush2.bf16.msra.mxu0 0
    %704 = vmatprep.subr.bf16.mxu0 0
    %705 = vmatpush2.bf16.msra.mxu0 0
    %706 = vmatprep.subr.bf16.mxu0 0
    %707 = vmatpush2.bf16.msra.mxu0 0
    %708 = vmatprep.subr.bf16.mxu0 0
    %709 = vmatpush2.bf16.msra.mxu0 0
    %710 = vmatprep.mubr.bf16.mxu0 0
    %711 = vmatmul.mubr.bf16.gmra.mxu0 %v606
    %v712 = vpop.f32.mrf.mxu0
    %v713 = vadd.f32 %v628, %v712
    %v714 = vpop.f32.mrf.mxu0
    %v715 = vpop.f32.mrf.mxu0
    %v716 = vpop.f32.mrf.mxu0
    %717 = vdwg.mxu0
    %v718 = vmax.f32 %v713, 0.0
    %v719 = vpack.c.bf16 %v718, %v718
    %v720 = vld [vmem:[%s5] sm:$0xff]
    %v721 = vld [vmem:[%s5 + $0x8] sm:$0xff]
    %v722 = vld [vmem:[%s5 + $0x10] sm:$0xff]
    %v723 = vld [vmem:[%s5 + $0x18] sm:$0xf]
    %v724 = vld [vmem:[%s5 + $0x1c] sm:$0xff]
    %v725 = vld [vmem:[%s5 + $0x24] sm:$0xff]
    %v726 = vld [vmem:[%s5 + $0x2c] sm:$0xff]
    %v727 = vld [vmem:[%s5 + $0x34] sm:$0xf]
    %v728 = vld [vmem:[%s5 + $0x38] sm:$0xff]
    %v729 = vld [vmem:[%s5 + $0x40] sm:$0xff]
    %v730 = vld [vmem:[%s5 + $0x48] sm:$0xff]
    %v731 = vld [vmem:[%s5 + $0x50] sm:$0xf]
    %v732 = vld [vmem:[%s5 + $0x54] sm:$0xff]
    %v733 = vld [vmem:[%s5 + $0x5c] sm:$0xff]
    %v734 = vld [vmem:[%s5 + $0x64] sm:$0xff]
    %v735 = vld [vmem:[%s5 + $0x6c] sm:$0xf]
    %v736 = vld [vmem:[%s5 + $0x70] sm:$0xff]
    %v737 = vld [vmem:[%s5 + $0x78] sm:$0xff]
    %v738 = vld [vmem:[%s5 + $0x80] sm:$0xff]
    %v739 = vld [vmem:[%s5 + $0x88] sm:$0xf]
    %v740 = vld [vmem:[%s5 + $0x8c] sm:$0xff]
    %v741 = vld [vmem:[%s5 + $0x94] sm:$0xff]
    %v742 = vld [vmem:[%s5 + $0x9c] sm:$0xff]
    %v743 = vld [vmem:[%s5 + $0xa4] sm:$0xf]
    %v744 = vld [vmem:[%s5 + $0xa8] sm:$0xff]
    %v745 = vld [vmem:[%s5 + $0xb0] sm:$0xff]
    %v746 = vld [vmem:[%s5 + $0xb8] sm:$0xff]
    %v747 = vld [vmem:[%s5 + $0xc0] sm:$0xf]
    %v748 = vld [vmem:[%s5 + $0xc4] sm:$0xff]
    %v749 = vld [vmem:[%s5 + $0xcc] sm:$0xff]
    %v750 = vld [vmem:[%s5 + $0xd4] sm:$0xff]
    %v751 = vld [vmem:[%s5 + $0xdc] sm:$0xf]
    %v752 = vld [vmem:[%s5 + $0xe0] sm:$0xff]
    %v753 = vld [vmem:[%s5 + $0xe8] sm:$0xff]
    %v754 = vld [vmem:[%s5 + $0xf0] sm:$0xff]
    %v755 = vld [vmem:[%s5 + $0xf8] sm:$0xf]
    %v756 = vld [vmem:[%s5 + $0xfc] sm:$0xff]
    %v757 = vld [vmem:[%s5 + $0x104] sm:$0xff]
    %v758 = vld [vmem:[%s5 + $0x10c] sm:$0xff]
    %v759 = vld [vmem:[%s5 + $0x114] sm:$0xf]
    %v760 = vld [vmem:[%s5 + $0x118] sm:$0xff]
    %v761 = vld [vmem:[%s5 + $0x120] sm:$0xff]
    %v762 = vld [vmem:[%s5 + $0x128] sm:$0xff]
    %v763 = vld [vmem:[%s5 + $0x130] sm:$0xf]
    %v764 = vld [vmem:[%s5 + $0x134] sm:$0xff]
    %v765 = vld [vmem:[%s5 + $0x13c] sm:$0xff]
    %v766 = vld [vmem:[%s5 + $0x144] sm:$0xff]
    %v767 = vld [vmem:[%s5 + $0x14c] sm:$0xf]
    %v768 = vld [vmem:[%s5 + $0x150] sm:$0xff]
    %v769 = vld [vmem:[%s5 + $0x158] sm:$0xff]
    %v770 = vld [vmem:[%s5 + $0x160] sm:$0xff]
    %v771 = vld [vmem:[%s5 + $0x168] sm:$0xf]
    %v772 = vld [vmem:[%s5 + $0x16c] sm:$0xff]
    %v773 = vld [vmem:[%s5 + $0x174] sm:$0xff]
    %v774 = vld [vmem:[%s5 + $0x17c] sm:$0xff]
    %v775 = vld [vmem:[%s5 + $0x184] sm:$0xf]
    %v776 = vld [vmem:[%s5 + $0x188] sm:$0xff]
    %v777 = vld [vmem:[%s5 + $0x190] sm:$0xff]
    %v778 = vld [vmem:[%s5 + $0x198] sm:$0xff]
    %v779 = vld [vmem:[%s5 + $0x1a0] sm:$0xf]
    %v780 = vld [vmem:[%s5 + $0x1a4] sm:$0xff]
    %v781 = vld [vmem:[%s5 + $0x1ac] sm:$0xff]
    %v782 = vld [vmem:[%s5 + $0x1b4] sm:$0xff]
    %v783 = vld [vmem:[%s5 + $0x1bc] sm:$0xf]
    %v784 = vld [vmem:[%s6] sm:$0x7f]
    %v786 = vlaneseq
    %v787 = vshrl.u32 %v786, 7
    %v788 = vsub.s32 0, %v787
    %v789 = vrot.slane %v784, %v788
    %v790 = vlaneseq
    %v791 = vshrl.u32 %v790, 7
    %v792 = vsub.s32 1, %v791
    %v793 = vrot.slane %v784, %v792
    %v794 = vlaneseq
    %v795 = vshrl.u32 %v794, 7
    %v796 = vsub.s32 2, %v795
    %v797 = vrot.slane %v784, %v796
    %v798 = vlaneseq
    %v799 = vshrl.u32 %v798, 7
    %v800 = vsub.s32 3, %v799
    %v801 = vrot.slane %v784, %v800
    %v802 = vlaneseq
    %v803 = vshrl.u32 %v802, 7
    %v804 = vsub.s32 4, %v803
    %v805 = vrot.slane %v784, %v804
    %v806 = vlaneseq
    %v807 = vshrl.u32 %v806, 7
    %v808 = vsub.s32 5, %v807
    %v809 = vrot.slane %v784, %v808
    %v810 = vlaneseq
    %v811 = vshrl.u32 %v810, 7
    %v812 = vsub.s32 6, %v811
    %v813 = vrot.slane %v784, %v812
    %v885 = vunpack.c.l.b16 %v720
    %v886 = vunpack.c.h.b16 %v720
    %v887 = vunpack.c.l.b16 %v721
    %v888 = vunpack.c.h.b16 %v721
    %v889 = vunpack.c.l.b16 %v722
    %v890 = vunpack.c.h.b16 %v722
    %v891 = vunpack.c.l.b16 %v723
    %v892 = vunpack.c.l.b16 %v724
    %v893 = vunpack.c.h.b16 %v724
    %v894 = vunpack.c.l.b16 %v725
    %v895 = vunpack.c.h.b16 %v725
    %v896 = vunpack.c.l.b16 %v726
    %v897 = vunpack.c.h.b16 %v726
    %v898 = vunpack.c.l.b16 %v727
    %v899 = vunpack.c.l.b16 %v728
    %v900 = vunpack.c.h.b16 %v728
    %v901 = vunpack.c.l.b16 %v729
    %v902 = vunpack.c.h.b16 %v729
    %v903 = vunpack.c.l.b16 %v730
    %v904 = vunpack.c.h.b16 %v730
    %v905 = vunpack.c.l.b16 %v731
    %v906 = vunpack.c.l.b16 %v732
    %v907 = vunpack.c.h.b16 %v732
    %v908 = vunpack.c.l.b16 %v733
    %v909 = vunpack.c.h.b16 %v733
    %v910 = vunpack.c.l.b16 %v734
    %v911 = vunpack.c.h.b16 %v734
    %v912 = vunpack.c.l.b16 %v735
    %v913 = vunpack.c.l.b16 %v736
    %v914 = vunpack.c.h.b16 %v736
    %v915 = vunpack.c.l.b16 %v737
    %v916 = vunpack.c.h.b16 %v737
    %v917 = vunpack.c.l.b16 %v738
    %v918 = vunpack.c.h.b16 %v738
    %v919 = vunpack.c.l.b16 %v739
    %v920 = vunpack.c.l.b16 %v740
    %v921 = vunpack.c.h.b16 %v740
    %v922 = vunpack.c.l.b16 %v741
    %v923 = vunpack.c.h.b16 %v741
    %v924 = vunpack.c.l.b16 %v742
    %v925 = vunpack.c.h.b16 %v742
    %v926 = vunpack.c.l.b16 %v743
    %v927 = vunpack.c.l.b16 %v744
    %v928 = vunpack.c.h.b16 %v744
    %v929 = vunpack.c.l.b16 %v745
    %v930 = vunpack.c.h.b16 %v745
    %v931 = vunpack.c.l.b16 %v746
    %v932 = vunpack.c.h.b16 %v746
    %v933 = vunpack.c.l.b16 %v747
    %v934 = vunpack.c.l.b16 %v748
    %v935 = vunpack.c.h.b16 %v748
    %v936 = vunpack.c.l.b16 %v749
    %v937 = vunpack.c.h.b16 %v749
    %v938 = vunpack.c.l.b16 %v750
    %v939 = vunpack.c.h.b16 %v750
    %v940 = vunpack.c.l.b16 %v751
    %v941 = vunpack.c.l.b16 %v752
    %v942 = vunpack.c.h.b16 %v752
    %v943 = vunpack.c.l.b16 %v753
    %v944 = vunpack.c.h.b16 %v753
    %v945 = vunpack.c.l.b16 %v754
    %v946 = vunpack.c.h.b16 %v754
    %v947 = vunpack.c.l.b16 %v755
    %v948 = vunpack.c.l.b16 %v756
    %v949 = vunpack.c.h.b16 %v756
    %v950 = vunpack.c.l.b16 %v757
    %v951 = vunpack.c.h.b16 %v757
    %v952 = vunpack.c.l.b16 %v758
    %v953 = vunpack.c.h.b16 %v758
    %v954 = vunpack.c.l.b16 %v759
    %v955 = vunpack.c.l.b16 %v760
    %v956 = vunpack.c.h.b16 %v760
    %v957 = vunpack.c.l.b16 %v761
    %v958 = vunpack.c.h.b16 %v761
    %v959 = vunpack.c.l.b16 %v762
    %v960 = vunpack.c.h.b16 %v762
    %v961 = vunpack.c.l.b16 %v763
    %v962 = vunpack.c.l.b16 %v764
    %v963 = vunpack.c.h.b16 %v764
    %v964 = vunpack.c.l.b16 %v765
    %v965 = vunpack.c.h.b16 %v765
    %v966 = vunpack.c.l.b16 %v766
    %v967 = vunpack.c.h.b16 %v766
    %v968 = vunpack.c.l.b16 %v767
    %v969 = vunpack.c.l.b16 %v768
    %v970 = vunpack.c.h.b16 %v768
    %v971 = vunpack.c.l.b16 %v769
    %v972 = vunpack.c.h.b16 %v769
    %v973 = vunpack.c.l.b16 %v770
    %v974 = vunpack.c.h.b16 %v770
    %v975 = vunpack.c.l.b16 %v771
    %v976 = vunpack.c.l.b16 %v772
    %v977 = vunpack.c.h.b16 %v772
    %v978 = vunpack.c.l.b16 %v773
    %v979 = vunpack.c.h.b16 %v773
    %v980 = vunpack.c.l.b16 %v774
    %v981 = vunpack.c.h.b16 %v774
    %v982 = vunpack.c.l.b16 %v775
    %v983 = vunpack.c.l.b16 %v776
    %v984 = vunpack.c.h.b16 %v776
    %v985 = vunpack.c.l.b16 %v777
    %v986 = vunpack.c.h.b16 %v777
    %v987 = vunpack.c.l.b16 %v778
    %v988 = vunpack.c.h.b16 %v778
    %v989 = vunpack.c.l.b16 %v779
    %v990 = vunpack.c.l.b16 %v780
    %v991 = vunpack.c.h.b16 %v780
    %v992 = vunpack.c.l.b16 %v781
    %v993 = vunpack.c.h.b16 %v781
    %v994 = vunpack.c.l.b16 %v782
    %v995 = vunpack.c.h.b16 %v782
    %v996 = vunpack.c.l.b16 %v783
    %v997 = vpack.c.b16 %v892, %v885
    %v998 = vpack.c.b16 %v893, %v886
    %v999 = vpack.c.b16 %v894, %v887
    %v1000 = vpack.c.b16 %v895, %v888
    %v1001 = vpack.c.b16 %v896, %v889
    %v1002 = vpack.c.b16 %v897, %v890
    %v1003 = vpack.c.b16 %v898, %v891
    %v1004 = vpack.c.b16 %v906, %v899
    %v1005 = vpack.c.b16 %v907, %v900
    %v1006 = vpack.c.b16 %v908, %v901
    %v1007 = vpack.c.b16 %v909, %v902
    %v1008 = vpack.c.b16 %v910, %v903
    %v1009 = vpack.c.b16 %v911, %v904
    %v1010 = vpack.c.b16 %v912, %v905
    %v1011 = vpack.c.b16 %v920, %v913
    %v1012 = vpack.c.b16 %v921, %v914
    %v1013 = vpack.c.b16 %v922, %v915
    %v1014 = vpack.c.b16 %v923, %v916
    %v1015 = vpack.c.b16 %v924, %v917
    %v1016 = vpack.c.b16 %v925, %v918
    %v1017 = vpack.c.b16 %v926, %v919
    %v1018 = vpack.c.b16 %v934, %v927
    %v1019 = vpack.c.b16 %v935, %v928
    %v1020 = vpack.c.b16 %v936, %v929
    %v1021 = vpack.c.b16 %v937, %v930
    %v1022 = vpack.c.b16 %v938, %v931
    %v1023 = vpack.c.b16 %v939, %v932
    %v1024 = vpack.c.b16 %v940, %v933
    %v1025 = vpack.c.b16 %v948, %v941
    %v1026 = vpack.c.b16 %v949, %v942
    %v1027 = vpack.c.b16 %v950, %v943
    %v1028 = vpack.c.b16 %v951, %v944
    %v1029 = vpack.c.b16 %v952, %v945
    %v1030 = vpack.c.b16 %v953, %v946
    %v1031 = vpack.c.b16 %v954, %v947
    %v1032 = vpack.c.b16 %v962, %v955
    %v1033 = vpack.c.b16 %v963, %v956
    %v1034 = vpack.c.b16 %v964, %v957
    %v1035 = vpack.c.b16 %v965, %v958
    %v1036 = vpack.c.b16 %v966, %v959
    %v1037 = vpack.c.b16 %v967, %v960
    %v1038 = vpack.c.b16 %v968, %v961
    %v1039 = vpack.c.b16 %v976, %v969
    %v1040 = vpack.c.b16 %v977, %v970
    %v1041 = vpack.c.b16 %v978, %v971
    %v1042 = vpack.c.b16 %v979, %v972
    %v1043 = vpack.c.b16 %v980, %v973
    %v1044 = vpack.c.b16 %v981, %v974
    %v1045 = vpack.c.b16 %v982, %v975
    %v1046 = vpack.c.b16 %v990, %v983
    %v1047 = vpack.c.b16 %v991, %v984
    %v1048 = vpack.c.b16 %v992, %v985
    %v1049 = vpack.c.b16 %v993, %v986
    %v1050 = vpack.c.b16 %v994, %v987
    %v1051 = vpack.c.b16 %v995, %v988
    %v1052 = vpack.c.b16 %v996, %v989
    %1109 = vmatprep.subr.bf16.mxu0 %v1047
    %1110 = vmatpush1.bf16.msra.mxu0 %v1046
    %1111 = vmatprep.subr.bf16.mxu0 %v1040
    %1112 = vmatpush1.bf16.msra.mxu0 %v1039
    %1113 = vmatprep.subr.bf16.mxu0 %v1033
    %1114 = vmatpush1.bf16.msra.mxu0 %v1032
    %1115 = vmatprep.subr.bf16.mxu0 %v1026
    %1116 = vmatpush1.bf16.msra.mxu0 %v1025
    %1117 = vmatprep.subr.bf16.mxu0 %v1019
    %1118 = vmatpush1.bf16.msra.mxu0 %v1018
    %1119 = vmatprep.subr.bf16.mxu0 %v1012
    %1120 = vmatpush1.bf16.msra.mxu0 %v1011
    %1121 = vmatprep.subr.bf16.mxu0 %v1005
    %1122 = vmatpush1.bf16.msra.mxu0 %v1004
    %1123 = vmatprep.subr.bf16.mxu0 %v998
    %1124 = vmatpush1.bf16.msra.mxu0 %v997
    %1125 = vmatprep.subr.bf16.mxu0 0
    %1126 = vmatpush2.bf16.msra.mxu0 0
    %1127 = vmatprep.subr.bf16.mxu0 0
    %1128 = vmatpush2.bf16.msra.mxu0 0
    %1129 = vmatprep.subr.bf16.mxu0 0
    %1130 = vmatpush2.bf16.msra.mxu0 0
    %1131 = vmatprep.subr.bf16.mxu0 0
    %1132 = vmatpush2.bf16.msra.mxu0 0
    %1133 = vmatprep.subr.bf16.mxu0 0
    %1134 = vmatpush2.bf16.msra.mxu0 0
    %1135 = vmatprep.subr.bf16.mxu0 0
    %1136 = vmatpush2.bf16.msra.mxu0 0
    %1137 = vmatprep.subr.bf16.mxu0 0
    %1138 = vmatpush2.bf16.msra.mxu0 0
    %1139 = vmatprep.subr.bf16.mxu0 0
    %1140 = vmatpush2.bf16.msra.mxu0 0
    %1141 = vmatprep.mubr.bf16.mxu0 0
    %1142 = vmatmul.mubr.bf16.gmra.mxu0 %v719
    %v1143 = vpop.f32.mrf.mxu0
    %v1144 = vadd.f32 %v789, %v1143
    %v1145 = vpop.f32.mrf.mxu0
    %v1146 = vadd.f32 %v793, %v1145
    %v1147 = vpop.f32.mrf.mxu0
    %v1148 = vpop.f32.mrf.mxu0
    %1149 = vdwg.mxu0
    %1150 = vmatprep.subr.bf16.mxu0 %v1049
    %1151 = vmatpush1.bf16.msra.mxu0 %v1048
    %1152 = vmatprep.subr.bf16.mxu0 %v1042
    %1153 = vmatpush1.bf16.msra.mxu0 %v1041
    %1154 = vmatprep.subr.bf16.mxu0 %v1035
    %1155 = vmatpush1.bf16.msra.mxu0 %v1034
    %1156 = vmatprep.subr.bf16.mxu0 %v1028
    %1157 = vmatpush1.bf16.msra.mxu0 %v1027
    %1158 = vmatprep.subr.bf16.mxu0 %v1021
    %1159 = vmatpush1.bf16.msra.mxu0 %v1020
    %1160 = vmatprep.subr.bf16.mxu0 %v1014
    %1161 = vmatpush1.bf16.msra.mxu0 %v1013
    %1162 = vmatprep.subr.bf16.mxu0 %v1007
    %1163 = vmatpush1.bf16.msra.mxu0 %v1006
    %1164 = vmatprep.subr.bf16.mxu0 %v1000
    %1165 = vmatpush1.bf16.msra.mxu0 %v999
    %1166 = vmatprep.subr.bf16.mxu0 0
    %1167 = vmatpush2.bf16.msra.mxu0 0
    %1168 = vmatprep.subr.bf16.mxu0 0
    %1169 = vmatpush2.bf16.msra.mxu0 0
    %1170 = vmatprep.subr.bf16.mxu0 0
    %1171 = vmatpush2.bf16.msra.mxu0 0
    %1172 = vmatprep.subr.bf16.mxu0 0
    %1173 = vmatpush2.bf16.msra.mxu0 0
    %1174 = vmatprep.subr.bf16.mxu0 0
    %1175 = vmatpush2.bf16.msra.mxu0 0
    %1176 = vmatprep.subr.bf16.mxu0 0
    %1177 = vmatpush2.bf16.msra.mxu0 0
    %1178 = vmatprep.subr.bf16.mxu0 0
    %1179 = vmatpush2.bf16.msra.mxu0 0
    %1180 = vmatprep.subr.bf16.mxu0 0
    %1181 = vmatpush2.bf16.msra.mxu0 0
    %1182 = vmatprep.mubr.bf16.mxu0 0
    %1183 = vmatmul.mubr.bf16.gmra.mxu0 %v719
    %v1184 = vpop.f32.mrf.mxu0
    %v1185 = vadd.f32 %v797, %v1184
    %v1186 = vpop.f32.mrf.mxu0
    %v1187 = vadd.f32 %v801, %v1186
    %v1188 = vpop.f32.mrf.mxu0
    %v1189 = vpop.f32.mrf.mxu0
    %1190 = vdwg.mxu0
    %1191 = vmatprep.subr.bf16.mxu0 %v1051
    %1192 = vmatpush1.bf16.msra.mxu0 %v1050
    %1193 = vmatprep.subr.bf16.mxu0 %v1044
    %1194 = vmatpush1.bf16.msra.mxu0 %v1043
    %1195 = vmatprep.subr.bf16.mxu0 %v1037
    %1196 = vmatpush1.bf16.msra.mxu0 %v1036
    %1197 = vmatprep.subr.bf16.mxu0 %v1030
    %1198 = vmatpush1.bf16.msra.mxu0 %v1029
    %1199 = vmatprep.subr.bf16.mxu0 %v1023
    %1200 = vmatpush1.bf16.msra.mxu0 %v1022
    %1201 = vmatprep.subr.bf16.mxu0 %v1016
    %1202 = vmatpush1.bf16.msra.mxu0 %v1015
    %1203 = vmatprep.subr.bf16.mxu0 %v1009
    %1204 = vmatpush1.bf16.msra.mxu0 %v1008
    %1205 = vmatprep.subr.bf16.mxu0 %v1002
    %1206 = vmatpush1.bf16.msra.mxu0 %v1001
    %1207 = vmatprep.subr.bf16.mxu0 0
    %1208 = vmatpush2.bf16.msra.mxu0 0
    %1209 = vmatprep.subr.bf16.mxu0 0
    %1210 = vmatpush2.bf16.msra.mxu0 0
    %1211 = vmatprep.subr.bf16.mxu0 0
    %1212 = vmatpush2.bf16.msra.mxu0 0
    %1213 = vmatprep.subr.bf16.mxu0 0
    %1214 = vmatpush2.bf16.msra.mxu0 0
    %1215 = vmatprep.subr.bf16.mxu0 0
    %1216 = vmatpush2.bf16.msra.mxu0 0
    %1217 = vmatprep.subr.bf16.mxu0 0
    %1218 = vmatpush2.bf16.msra.mxu0 0
    %1219 = vmatprep.subr.bf16.mxu0 0
    %1220 = vmatpush2.bf16.msra.mxu0 0
    %1221 = vmatprep.subr.bf16.mxu0 0
    %1222 = vmatpush2.bf16.msra.mxu0 0
    %1223 = vmatprep.mubr.bf16.mxu0 0
    %1224 = vmatmul.mubr.bf16.gmra.mxu0 %v719
    %v1225 = vpop.f32.mrf.mxu0
    %v1226 = vadd.f32 %v805, %v1225
    %v1227 = vpop.f32.mrf.mxu0
    %v1228 = vadd.f32 %v809, %v1227
    %v1229 = vpop.f32.mrf.mxu0
    %v1230 = vpop.f32.mrf.mxu0
    %1231 = vdwg.mxu0
    %1232 = vmatprep.subr.bf16.mxu0 0
    %1233 = vmatpush1.bf16.msra.mxu0 %v1052
    %1234 = vmatprep.subr.bf16.mxu0 0
    %1235 = vmatpush1.bf16.msra.mxu0 %v1045
    %1236 = vmatprep.subr.bf16.mxu0 0
    %1237 = vmatpush1.bf16.msra.mxu0 %v1038
    %1238 = vmatprep.subr.bf16.mxu0 0
    %1239 = vmatpush1.bf16.msra.mxu0 %v1031
    %1240 = vmatprep.subr.bf16.mxu0 0
    %1241 = vmatpush1.bf16.msra.mxu0 %v1024
    %1242 = vmatprep.subr.bf16.mxu0 0
    %1243 = vmatpush1.bf16.msra.mxu0 %v1017
    %1244 = vmatprep.subr.bf16.mxu0 0
    %1245 = vmatpush1.bf16.msra.mxu0 %v1010
    %1246 = vmatprep.subr.bf16.mxu0 0
    %1247 = vmatpush1.bf16.msra.mxu0 %v1003
    %1248 = vmatprep.subr.bf16.mxu0 0
    %1249 = vmatpush2.bf16.msra.mxu0 0
    %1250 = vmatprep.subr.bf16.mxu0 0
    %1251 = vmatpush2.bf16.msra.mxu0 0
    %1252 = vmatprep.subr.bf16.mxu0 0
    %1253 = vmatpush2.bf16.msra.mxu0 0
    %1254 = vmatprep.subr.bf16.mxu0 0
    %1255 = vmatpush2.bf16.msra.mxu0 0
    %1256 = vmatprep.subr.bf16.mxu0 0
    %1257 = vmatpush2.bf16.msra.mxu0 0
    %1258 = vmatprep.subr.bf16.mxu0 0
    %1259 = vmatpush2.bf16.msra.mxu0 0
    %1260 = vmatprep.subr.bf16.mxu0 0
    %1261 = vmatpush2.bf16.msra.mxu0 0
    %1262 = vmatprep.subr.bf16.mxu0 0
    %1263 = vmatpush2.bf16.msra.mxu0 0
    %1264 = vmatprep.mubr.bf16.mxu0 0
    %1265 = vmatmul.mubr.bf16.gmra.mxu0 %v719
    %v1266 = vpop.f32.mrf.mxu0
    %v1267 = vadd.f32 %v813, %v1266
    %v1268 = vpop.f32.mrf.mxu0
    %v1269 = vpop.f32.mrf.mxu0
    %v1270 = vpop.f32.mrf.mxu0
    %1271 = vdwg.mxu0
    %v1272 = vsub.f32 0.0, %v1144
    %v1273 = vsub.f32 0.0, %v1146
    %v1274 = vsub.f32 0.0, %v1185
    %v1275 = vsub.f32 0.0, %v1187
    %v1276 = vsub.f32 0.0, %v1226
    %v1277 = vsub.f32 0.0, %v1228
    %v1278 = vsub.f32 0.0, %v1267
    %v1279 = vmul.f32 %v1272, 1.442695
    %v1280 = vpow.pop %v1279
    %v1281 = vmul.f32 %v1273, 1.442695
    %v1282 = vpow.pop %v1281
    %v1283 = vmul.f32 %v1274, 1.442695
    %v1284 = vpow.pop %v1283
    %v1285 = vmul.f32 %v1275, 1.442695
    %v1286 = vpow.pop %v1285
    %v1287 = vmul.f32 %v1276, 1.442695
    %v1288 = vpow.pop %v1287
    %v1289 = vmul.f32 %v1277, 1.442695
    %v1290 = vpow.pop %v1289
    %v1291 = vmul.f32 %v1278, 1.442695
    %v1292 = vpow.pop %v1291
    %v1293 = vadd.f32 %v1280, 1.0
    %v1294 = vadd.f32 %v1282, 1.0
    %v1295 = vadd.f32 %v1284, 1.0
    %v1296 = vadd.f32 %v1286, 1.0
    %v1297 = vadd.f32 %v1288, 1.0
    %v1298 = vadd.f32 %v1290, 1.0
    %v1299 = vadd.f32 %v1292, 1.0
    %v1300 = vrcp.pop %v1293
    %v1301 = vrcp.pop %v1294
    %v1302 = vrcp.pop %v1295
    %v1303 = vrcp.pop %v1296
    %v1304 = vrcp.pop %v1297
    %v1305 = vrcp.pop %v1298
    %v1306 = vrcp.pop %v1299
    %1307 = vst [vmem:[#allocation2] sm:$0xff] %v1300
    %1308 = vst [vmem:[#allocation2 + $0x8] sm:$0xff] %v1301
    %1309 = vst [vmem:[#allocation2 + $0x10] sm:$0xff] %v1302
    %1310 = vst [vmem:[#allocation2 + $0x18] sm:$0xff] %v1303
    %1311 = vst [vmem:[#allocation2 + $0x20] sm:$0xff] %v1304
    %1312 = vst [vmem:[#allocation2 + $0x28] sm:$0xff] %v1305
    %1313 = vst.msk [vmem:[#allocation2 + $0x30] sm:$0xff] %vm441, %v1306
    // Predicated region
    $region30: #{tpu_custom_call.1} parent=1 // pred_check
      _
    $region31: #{tpu_custom_call.1} parent=1 // pred_check_branch
      %1315 = sbr.rel (0) target = $region33
    $region32: #{tpu_custom_call.1} parent=1 // pred_region
      %s1317 = ssub.s32 896, 896
      %1318 = vsyncadd [#allocation3], %s1317
      %s1320 = sshll.u32 [#allocation2], 4
      %s1321 = int_to_ptr.vmem [resolvable:$true] %s1320
      %1323 = dma.vmem_to_hbm [thread:$0]  %s1321, 896, %s7, [#allocation3]
    $region33: #{tpu_custom_call.1} parent=1 // pred_fallthru
      _
    // Predicated region
    $region34: #{tpu_custom_call.1} parent=1 // pred_check
      _
    $region35: #{tpu_custom_call.1} parent=1 // pred_check_branch
      %1325 = sbr.rel (0) target = $region37
    $region36: #{tpu_custom_call.1} parent=1 // pred_region
      %1326 = dma.done [#allocation3], 896
    $region37: #{tpu_custom_call.1} parent=1 // pred_fallthru
      _
    %1327 = vsyncpa [#allocation3], 1

</llo_original>
